<compile_context>
chip_gen: v5e
topology: v5e:2x2
jax: 0.10.0
libtpu: 0.0.40
codegen_flags: <defaults>
</compile_context>

<pallas_src>
import math
import functools

import jax
import jax.numpy as jnp
from jax import lax
from jax.experimental import pallas as pl
from jax.experimental.pallas import tpu as pltpu


def _fmix32(x):
    """murmur3 32-bit finalizer: well-mixed uint32 from a uint32 counter."""
    x = x ^ (x >> 16)
    x = x * jnp.uint32(0x85EBCA6B)
    x = x ^ (x >> 13)
    x = x * jnp.uint32(0xC2B2AE35)
    x = x ^ (x >> 16)
    return x


def _pos_enc_kernel(seed_ref, x_ref, pe_ref, o_ref, *, dropout_p, training,
                    block_rows):
    """One grid step handles `block_rows` sequence positions.

    seed_ref : scalar-prefetch int32 seed (SMEM)
    x_ref    : (TS, B, D) VMEM tile of the input
    pe_ref   : (TS, D)    VMEM tile of the positional-encoding rows
    o_ref    : (TS, B, D) output tile
    """
    x = x_ref[...]
    pe = pe_ref[...]
    # Broadcast pe over the batch axis inside the kernel (keeps pe HBM traffic
    # at ~1/B of the x traffic; do NOT pre-broadcast in the wrapper).
    y = x + pe[:, None, :]

    if training and dropout_p > 0.0:
        ts, b, d = y.shape
        # Stateless counter-based RNG: hash(seed, global element index).
        # Tiling-independent, deterministic, and portable (no pltpu.prng_*).
        row0 = pl.program_id(0) * block_rows
        s_idx = lax.broadcasted_iota(jnp.int32, (ts, b, d), 0) + row0
        b_idx = lax.broadcasted_iota(jnp.int32, (ts, b, d), 1)
        d_idx = lax.broadcasted_iota(jnp.int32, (ts, b, d), 2)
        gid = (s_idx * b + b_idx) * d + d_idx            # global element index
        seed_mix = seed_ref[0].astype(jnp.uint32) * jnp.uint32(0x9E3779B9)
        bits = _fmix32(gid.astype(jnp.uint32) ^ seed_mix)
        # Integer-threshold compare on 24 high bits: P(drop) == dropout_p to
        # within 2^-24.  No uint->float conversion on the VPU path.
        thresh = jnp.int32(int(round(float(dropout_p) * float(1 << 24))))
        keep = (bits >> 8).astype(jnp.int32) >= thresh
        # Inverted dropout, matching nn.Dropout(p) training semantics; scale
        # stays in the compute dtype (no f32 widening of bf16 tiles).
        scale = jnp.asarray(1.0 / (1.0 - float(dropout_p)), dtype=y.dtype)
        y = jnp.where(keep, y * scale, jnp.zeros_like(y))

    o_ref[...] = y.astype(o_ref.dtype)


def make_positional_encoding_table(d_model, max_len=5000, dtype=jnp.float32):
    """Replicates the buffer built in PositionalEncoding.__init__ -> (max_len, 1, d_model)."""
    position = jnp.arange(0, max_len, dtype=jnp.float32)[:, None]
    div_term = jnp.exp(
        jnp.arange(0, d_model, 2, dtype=jnp.float32) * (-math.log(10000.0) / d_model)
    )
    pe = jnp.zeros((max_len, d_model), dtype=jnp.float32)
    pe = pe.at[:, 0::2].set(jnp.sin(position * div_term))
    pe = pe.at[:, 1::2].set(jnp.cos(position * div_term))
    return pe[:, None, :].astype(dtype)          # (max_len, 1, d_model)


def _pick_block_rows(S, B, D, itemsize):
    """Rows per tile: ~2 MiB x-tiles (amortizes ~0.35us/step overhead) while
    keeping double-buffered (x + pe + out) well under the default scoped VMEM
    on v5e/v6e/v7x."""
    target_bytes = 2 * 1024 * 1024
    ts = max(1, target_bytes // max(B * D * itemsize, 1))
    if ts >= S:
        return S
    # pe tile is 2D (TS, D): its second-to-last dim must be a multiple of the
    # sublane packing (8 for 32-bit, 16 for 16-bit dtypes) or equal S.
    align = 8 if itemsize >= 4 else 16
    ts = max(align, (ts // align) * align)
    return min(ts, S)


def positional_encoding_forward(x, pe, *, dropout_p=0.1, training=False, seed=0):
    """x: (S, B, D); pe: (max_len, 1, D).  Returns dropout(x + pe[:S])."""
    S, B, D = x.shape
    pe_2d = pe[:S, 0, :].astype(x.dtype)            # (S, D), 1/B of the x bytes
    seed_arr = jnp.asarray([seed], dtype=jnp.int32)

    itemsize = jnp.dtype(x.dtype).itemsize
    ts = _pick_block_rows(S, B, D, itemsize)
    grid = (pl.cdiv(S, ts),)

    kernel = functools.partial(
        _pos_enc_kernel,
        dropout_p=float(dropout_p),
        training=bool(training),
        block_rows=ts,
    )

    grid_spec = pltpu.PrefetchScalarGridSpec(
        num_scalar_prefetch=1,
        grid=grid,
        in_specs=[
            pl.BlockSpec((ts, B, D), lambda i, seed_ref: (i, 0, 0)),  # x tile
            pl.BlockSpec((ts, D), lambda i, seed_ref: (i, 0)),        # pe rows
        ],
        out_specs=pl.BlockSpec((ts, B, D), lambda i, seed_ref: (i, 0, 0)),
    )

    # Pure streaming add: advisory cost hint for XLA scheduling.
    cost = pl.CostEstimate(
        flops=2 * S * B * D,
        transcendentals=0,
        bytes_accessed=(2 * S * B * D + S * D) * itemsize,
    )

    return pl.pallas_call(
        kernel,
        out_shape=jax.ShapeDtypeStruct((S, B, D), x.dtype),
        grid_spec=grid_spec,
        compiler_params=pltpu.CompilerParams(
            # Tiles are fully independent (stateless per-element RNG), so the
            # sequence axis can be sharded across v7x's two TensorCores.
            dimension_semantics=("parallel",),
        ),
        cost_estimate=cost,
    )(seed_arr, x, pe_2d)


if __name__ == "__main__":
    # Small shapes consistent with the module's forward: x is (seq, batch, d_model).
    # d_model=128 keeps the last (lane) dim dense; still a small demo shape.
    S, B, D = 16, 2, 128
    key = jax.random.PRNGKey(0)
    x = jax.random.normal(key, (S, B, D), dtype=jnp.float32)

    pe = make_positional_encoding_table(d_model=D, max_len=5000)

    # Eval mode: dropout is identity, must match x + pe[:S] exactly.
    y_eval = jax.block_until_ready(
        positional_encoding_forward(x, pe, dropout_p=0.1, training=False)
    )
    y_ref = x + pe[:S]
    assert y_eval.shape == x.shape and y_eval.dtype == x.dtype
    assert jnp.allclose(y_eval, y_ref, atol=1e-6, rtol=1e-6), "eval-mode mismatch"

    # Training mode: inverted dropout.  RNG stream intentionally differs from
    # torch's (documented), but is deterministic given `seed` and the same for
    # any tile size.
    p = 0.1
    y_train = jax.block_until_ready(
        positional_encoding_forward(x, pe, dropout_p=p, training=True, seed=1234)
    )
    assert y_train.shape == x.shape
    assert bool(jnp.all(jnp.isfinite(y_train)))
    kept = y_train != 0.0
    # Survivors must equal (x + pe) / (1 - p).
    assert jnp.allclose(
        jnp.where(kept, y_train, 0.0),
        jnp.where(kept, y_ref / (1.0 - p), 0.0),
        atol=1e-5, rtol=1e-5,
    ), "training-mode survivor values mismatch"
    drop_frac = float(1.0 - jnp.mean(kept.astype(jnp.float32)))
    assert 0.02 <= drop_frac <= 0.25, f"dropout fraction looks wrong: {drop_frac}"

    print("KERNEL_OK")
</pallas_src>

<mosaic_0001>
module attributes {stable_mosaic.version = 11 : i64} {
  func.func @_pos_enc_kernel(%arg0: i32, %arg1: memref<1xi32, #tpu.memory_space<smem>>, %arg2: memref<16x2x128xf32, #tpu.memory_space<vmem>>, %arg3: memref<16x128xf32, #tpu.memory_space<vmem>>, %arg4: memref<16x2x128xf32, #tpu.memory_space<vmem>>) attributes {dimension_semantics = [#tpu.dimension_semantics<parallel>], iteration_bounds = array<i64: 1>, scalar_prefetch = 1 : i64, scratch_operands = 0 : i64, tpu.core_type = #tpu.core_type<tc>, window_params = [{transform_indices = @transform_0, window_bounds = array<i64: 16, 2, 128>}, {transform_indices = @transform_1, window_bounds = array<i64: 16, 128>}, {transform_indices = @transform_2, window_bounds = array<i64: 16, 2, 128>}]} {
    %c0 = arith.constant 0 : index
    %c0_0 = arith.constant 0 : index
    %c0_1 = arith.constant 0 : index
    %0 = vector.load %arg2[%c0, %c0_0, %c0_1] : memref<16x2x128xf32, #tpu.memory_space<vmem>>, vector<16x2x128xf32>
    %c0_2 = arith.constant 0 : index
    %c0_3 = arith.constant 0 : index
    %1 = vector.load %arg3[%c0_2, %c0_3] : memref<16x128xf32, #tpu.memory_space<vmem>>, vector<16x128xf32>
    %2 = vector.shape_cast %1 : vector<16x128xf32> to vector<16x1x128xf32>
    %3 = vector.broadcast %2 : vector<16x1x128xf32> to vector<16x2x128xf32>
    %4 = arith.addf %0, %3 : vector<16x2x128xf32>
    %c0_4 = arith.constant 0 : index
    %c0_5 = arith.constant 0 : index
    %c0_6 = arith.constant 0 : index
    %5 = vector.load %arg4[%c0_4, %c0_5, %c0_6] : memref<16x2x128xf32, #tpu.memory_space<vmem>>, vector<16x2x128xf32>
    tpu.vector_store %arg4[%c0_4, %c0_5, %c0_6], %4 {strides = array<i32>} : memref<16x2x128xf32, #tpu.memory_space<vmem>>, vector<16x2x128xf32>,
    return
  }
  func.func @transform_0(%arg0: i32, %arg1: memref<1xi32, #tpu.memory_space<smem>>) -> (i32, i32, i32) {
    %c0_i32 = arith.constant 0 : i32
    %c0_i32_0 = arith.constant 0 : i32
    %c0_i32_1 = arith.constant 0 : i32
    return %arg0, %c0_i32, %c0_i32_0 : i32, i32, i32
  }
  func.func @transform_1(%arg0: i32, %arg1: memref<1xi32, #tpu.memory_space<smem>>) -> (i32, i32) {
    %c0_i32 = arith.constant 0 : i32
    %c0_i32_0 = arith.constant 0 : i32
    return %arg0, %c0_i32 : i32, i32
  }
  func.func @transform_2(%arg0: i32, %arg1: memref<1xi32, #tpu.memory_space<smem>>) -> (i32, i32, i32) {
    %c0_i32 = arith.constant 0 : i32
    %c0_i32_0 = arith.constant 0 : i32
    %c0_i32_1 = arith.constant 0 : i32
    return %arg0, %c0_i32, %c0_i32_0 : i32, i32, i32
  }
}

</mosaic_0001>

<llo_original>
// kernel: tpu_custom_call.1
$region0: #{tpu_custom_call.1}
  #allocation0 [shape = 'u32[]', space=smem, size = 0x4, offset = 0x4, fixed_abs, tag = 'smem constant byte address 0x4 - core index']
  #allocation1 [shape = 'u32[72,128]{1,0:T(1,128)}', space=vmem, size = 0x9000, scoped, tag = 'internal scratch']
  #allocation2 [shape = 's32[1]{0}', space=sflag, size = 0x4, scoped, tag = 'scoped memory for tpu_custom_call.1']
  #allocation3 [shape = 's32[1]{0:T(128)S(6)}', space=smem, size = 0x200, scoped, tag = 'prefetched SMEM operand 0']
  %s0 = inlined_call_operand.<no memory space> [shape: s32[1], index: 0, kind: input, shape index: {}]
  %s1 = inlined_call_operand.hbm [shape: f32[16,2,128], index: 1, kind: input, shape index: {}]
  %s2 = inlined_call_operand.hbm [shape: f32[16,128], index: 2, kind: input, shape index: {}]
  %s3 = inlined_call_operand.hbm [shape: f32[16,2,128], index: 3, kind: output, shape index: {}]
  %s4 = sld [smem:[#allocation0]]
  $region26: #{tpu_custom_call.1} parent=0
    _
  %s6 = ssub.s32 1, %s4
  %s7 = scalar_select 0, %s6, %s4
  %8 = sst [smem:[#allocation3]] %s0
  $region1: #{tpu_custom_call.1} parent=0
    #allocation4 [shape = 'u8[16384]{0}', space=vmem, size = 0x4000, scoped, tag = 'input window, operand 1, single buffered']
    #allocation5 [shape = 's32[1]{0}', space=sflag, size = 0x4, scoped, tag = 'scoped memory for tpu_custom_call.1']
    #allocation6 [shape = 's32[1]{0}', space=sflag, size = 0x4, scoped, tag = 'scoped memory for tpu_custom_call.1']
    #allocation7 [shape = 'u8[8192]{0}', space=vmem, size = 0x2000, scoped, tag = 'input window, operand 2, single buffered']
    #allocation8 [shape = 's32[1]{0}', space=sflag, size = 0x4, scoped, tag = 'scoped memory for tpu_custom_call.1']
    #allocation9 [shape = 'u8[16384]{0}', space=vmem, size = 0x4000, scoped, tag = 'output window, operand 0, single buffered']
    %9 = vsyncpa [#allocation5], 0
    %10 = vsyncpa [#allocation8], 0
    %11 = vsyncpa [#allocation6], 0
    // Predicated region
    $region2: #{tpu_custom_call.1} parent=1 // pred_check
      _
    $region3: #{tpu_custom_call.1} parent=1 // pred_check_branch
      %13 = sbr.rel (0) target = $region5
    $region4: #{tpu_custom_call.1} parent=1 // pred_region
      %15 = vsyncadd [#allocation5], 0
      %s16 = sshll.u32 %s1, 4
      %s17 = int_to_ptr.hbm [resolvable:$true] %s16
      %s18 = sshll.u32 [#allocation4], 4
      %s19 = int_to_ptr.vmem [resolvable:$true] %s18
      %24 = dma.hbm_to_vmem [thread:$0]  %s17, 512, %s19, [#allocation5], 32, 32, 2
    $region5: #{tpu_custom_call.1} parent=1 // pred_fallthru
      _
    // Predicated region
    $region6: #{tpu_custom_call.1} parent=1 // pred_check
      _
    $region7: #{tpu_custom_call.1} parent=1 // pred_check_branch
      %26 = sbr.rel (0) target = $region9
    $region8: #{tpu_custom_call.1} parent=1 // pred_region
      %28 = vsyncadd [#allocation8], 0
      %s29 = sshll.u32 %s2, 4
      %s30 = int_to_ptr.hbm [resolvable:$true] %s29
      %s31 = sshll.u32 [#allocation7], 4
      %s32 = int_to_ptr.vmem [resolvable:$true] %s31
      %37 = dma.hbm_to_vmem [thread:$0]  %s30, 256, %s32, [#allocation8], 128, 128, 8
    $region9: #{tpu_custom_call.1} parent=1 // pred_fallthru
      _
    // Predicated region
    $region10: #{tpu_custom_call.1} parent=1 // pred_check
      _
    $region11: #{tpu_custom_call.1} parent=1 // pred_check_branch
      %39 = sbr.rel (0) target = $region13
    $region12: #{tpu_custom_call.1} parent=1 // pred_region
      %41 = dma.done [#allocation5], 512
    $region13: #{tpu_custom_call.1} parent=1 // pred_fallthru
      _
    // Predicated region
    $region14: #{tpu_custom_call.1} parent=1 // pred_check
      _
    $region15: #{tpu_custom_call.1} parent=1 // pred_check_branch
      %43 = sbr.rel (0) target = $region17
    $region16: #{tpu_custom_call.1} parent=1 // pred_region
      %45 = dma.done [#allocation8], 256
    $region17: #{tpu_custom_call.1} parent=1 // pred_fallthru
      _
    %v46 = vld [vmem:[#allocation4] sm:$0x3]
    %v47 = vld [vmem:[#allocation4 + $0x2] sm:$0x3]
    %v48 = vld [vmem:[#allocation4 + $0x4] sm:$0x3]
    %v49 = vld [vmem:[#allocation4 + $0x6] sm:$0x3]
    %v50 = vld [vmem:[#allocation4 + $0x8] sm:$0x3]
    %v51 = vld [vmem:[#allocation4 + $0xa] sm:$0x3]
    %v52 = vld [vmem:[#allocation4 + $0xc] sm:$0x3]
    %v53 = vld [vmem:[#allocation4 + $0xe] sm:$0x3]
    %v54 = vld [vmem:[#allocation4 + $0x10] sm:$0x3]
    %v55 = vld [vmem:[#allocation4 + $0x12] sm:$0x3]
    %v56 = vld [vmem:[#allocation4 + $0x14] sm:$0x3]
    %v57 = vld [vmem:[#allocation4 + $0x16] sm:$0x3]
    %v58 = vld [vmem:[#allocation4 + $0x18] sm:$0x3]
    %v59 = vld [vmem:[#allocation4 + $0x1a] sm:$0x3]
    %v60 = vld [vmem:[#allocation4 + $0x1c] sm:$0x3]
    %v61 = vld [vmem:[#allocation4 + $0x1e] sm:$0x3]
    %v62 = vld [vmem:[#allocation7] sm:$0xff]
    %v63 = vld [vmem:[#allocation7 + $0x8] sm:$0xff]
    %v66 = vrot.slane %v62, 1
    %v67 = vrot.slane %v62, 2
    %v68 = vrot.slane %v62, 3
    %v69 = vrot.slane %v62, 4
    %v70 = vrot.slane %v62, 5
    %v71 = vrot.slane %v62, 6
    %v72 = vrot.slane %v62, 7
    %v73 = vrot.slane %v63, 1
    %v74 = vrot.slane %v63, 2
    %v75 = vrot.slane %v63, 3
    %v76 = vrot.slane %v63, 4
    %v77 = vrot.slane %v63, 5
    %v78 = vrot.slane %v63, 6
    %v79 = vrot.slane %v63, 7
    %v80 = vperm.slane %v62, 0
    %v81 = vperm.slane %v66, 0
    %v82 = vperm.slane %v67, 0
    %v83 = vperm.slane %v68, 0
    %v84 = vperm.slane %v69, 0
    %v85 = vperm.slane %v70, 0
    %v86 = vperm.slane %v71, 0
    %v87 = vperm.slane %v72, 0
    %v88 = vperm.slane %v63, 0
    %v89 = vperm.slane %v73, 0
    %v90 = vperm.slane %v74, 0
    %v91 = vperm.slane %v75, 0
    %v92 = vperm.slane %v76, 0
    %v93 = vperm.slane %v77, 0
    %v94 = vperm.slane %v78, 0
    %v95 = vperm.slane %v79, 0
    %v112 = vadd.f32 %v46, %v80
    %v113 = vadd.f32 %v47, %v81
    %v114 = vadd.f32 %v48, %v82
    %v115 = vadd.f32 %v49, %v83
    %v116 = vadd.f32 %v50, %v84
    %v117 = vadd.f32 %v51, %v85
    %v118 = vadd.f32 %v52, %v86
    %v119 = vadd.f32 %v53, %v87
    %v120 = vadd.f32 %v54, %v88
    %v121 = vadd.f32 %v55, %v89
    %v122 = vadd.f32 %v56, %v90
    %v123 = vadd.f32 %v57, %v91
    %v124 = vadd.f32 %v58, %v92
    %v125 = vadd.f32 %v59, %v93
    %v126 = vadd.f32 %v60, %v94
    %v127 = vadd.f32 %v61, %v95
    %128 = vst [vmem:[#allocation9] sm:$0x3] %v112
    %129 = vst [vmem:[#allocation9 + $0x2] sm:$0x3] %v113
    %130 = vst [vmem:[#allocation9 + $0x4] sm:$0x3] %v114
    %131 = vst [vmem:[#allocation9 + $0x6] sm:$0x3] %v115
    %132 = vst [vmem:[#allocation9 + $0x8] sm:$0x3] %v116
    %133 = vst [vmem:[#allocation9 + $0xa] sm:$0x3] %v117
    %134 = vst [vmem:[#allocation9 + $0xc] sm:$0x3] %v118
    %135 = vst [vmem:[#allocation9 + $0xe] sm:$0x3] %v119
    %136 = vst [vmem:[#allocation9 + $0x10] sm:$0x3] %v120
    %137 = vst [vmem:[#allocation9 + $0x12] sm:$0x3] %v121
    %138 = vst [vmem:[#allocation9 + $0x14] sm:$0x3] %v122
    %139 = vst [vmem:[#allocation9 + $0x16] sm:$0x3] %v123
    %140 = vst [vmem:[#allocation9 + $0x18] sm:$0x3] %v124
    %141 = vst [vmem:[#allocation9 + $0x1a] sm:$0x3] %v125
    %142 = vst [vmem:[#allocation9 + $0x1c] sm:$0x3] %v126
    %143 = vst [vmem:[#allocation9 + $0x1e] sm:$0x3] %v127
    // Predicated region
    $region18: #{tpu_custom_call.1} parent=1 // pred_check
      _
    $region19: #{tpu_custom_call.1} parent=1 // pred_check_branch
      %145 = sbr.rel (0) target = $region21
    $region20: #{tpu_custom_call.1} parent=1 // pred_region
      %147 = vsyncadd [#allocation6], 0
      %s148 = sshll.u32 [#allocation9], 4
      %s149 = int_to_ptr.vmem [resolvable:$true] %s148
      %s150 = sshll.u32 %s3, 4
      %s151 = int_to_ptr.hbm [resolvable:$true] %s150
      %156 = dma.vmem_to_hbm [thread:$0]  %s149, 512, %s151, [#allocation6], 32, 32, 2
    $region21: #{tpu_custom_call.1} parent=1 // pred_fallthru
      _
    // Predicated region
    $region22: #{tpu_custom_call.1} parent=1 // pred_check
      _
    $region23: #{tpu_custom_call.1} parent=1 // pred_check_branch
      %158 = sbr.rel (0) target = $region25
    $region24: #{tpu_custom_call.1} parent=1 // pred_region
      %160 = dma.done [#allocation6], 512
    $region25: #{tpu_custom_call.1} parent=1 // pred_fallthru
      _
    %161 = vsyncpa [#allocation5], 1
    %162 = vsyncpa [#allocation8], 1
    %163 = vsyncpa [#allocation6], 1

</llo_original>
